<compile_context>
chip_gen: v7x
topology: tpu7x:2x2x1
jax: 0.10.0
libtpu: 0.0.40
codegen_flags: <defaults>
</compile_context>

<pallas_src>
import functools
import math

import jax
import jax.numpy as jnp
from jax.experimental import pallas as pl
from jax.experimental.pallas import tpu as pltpu

ACTION_LOW = -1.0
ACTION_HIGH = 1.0
ACTION_SHIFT = (ACTION_LOW + ACTION_HIGH) / 2.0   # 0.0
ACTION_SCALE = (ACTION_HIGH - ACTION_LOW) / 2.0   # 1.0
LOG2PI = math.log(2.0 * math.pi)
LOGSTD_MIN, LOGSTD_MAX = -20.0, 2.0


def _round_up(x, m):
    return ((x + m - 1) // m) * m


def _cdiv(a, b):
    return -(-a // b)


# --------------------------------------------------------------------------- kernel
def actor_kernel(x_ref, w1_ref, b1_ref, w2_ref, b2_ref, eps_ref, out_ref, *,
                 action_n, out_rows):
    """Transposed layout: features on sublanes, batch on lanes."""
    A = action_n
    TB = out_ref.shape[1]

    xT = x_ref[...]                                               # (D, TB)

    # Layer 1, both heads fused (rows 0:Hp = mu head, Hp:2Hp = logstd head); f32 acc.
    hT = jnp.dot(w1_ref[...], xT, preferred_element_type=jnp.float32) + b1_ref[...]
    hT = jnp.maximum(hT, 0.0)                                     # (2Hp, TB) f32

    # Layer 2, block diagonal: rows 0:A = mu, rows A:2A = logstd.
    yT = jnp.dot(w2_ref[...], hT.astype(w2_ref.dtype),
                 preferred_element_type=jnp.float32) + b2_ref[...]  # (2A, TB) f32

    muT = yT[:A, :]
    logstdT = jnp.clip(yT[A:2 * A, :], LOGSTD_MIN, LOGSTD_MAX)
    stdT = jnp.exp(logstdT)

    epsT = eps_ref[...]                                           # (A, TB) f32
    a_preT = muT + stdT * epsT                                    # rsample
    a_tT = jnp.tanh(a_preT)

    # Normal(mu,std).log_prob(a_pre) = -0.5*eps^2 - logstd - 0.5*log(2*pi); the tanh
    # ("paper") correction is fused into a single sublane reduce over the action dim.
    logpT = -0.5 * epsT * epsT - logstdT - 0.5 * LOG2PI
    corrT = jnp.log(jnp.clip(1.0 - a_tT * a_tT, 0.0, 1.0) + 1e-6)
    logpiT = jnp.sum(logpT - corrT, axis=0, keepdims=True)        # (1, TB)

    aT = a_tT * ACTION_SCALE + ACTION_SHIFT

    # Packed, lane-dense output slab: rows 0:A action, row A logpi, rest zero padding.
    out_ref[0:A, :] = aT
    out_ref[A:A + 1, :] = logpiT
    if A + 1 < out_rows:
        out_ref[A + 1:, :] = jnp.zeros((out_rows - A - 1, TB), jnp.float32)


# --------------------------------------------------------------------------- packing
def pack_actor_params(raw, mxu_dtype=jnp.bfloat16):
    """Fuse + transpose the per-head parameters.

    Returns (all transposed, MXU-ready):
      w1 [2*Hp, D]  rows 0:H = w1_mu^T, rows Hp:Hp+H = w1_ls^T   (zero-padded rows)
      b1 [2*Hp, 1]
      w2 [2*A, 2*Hp] block diagonal (rows 0:A x cols 0:H = w2_mu^T, rows A:2A x
                     cols Hp:Hp+H = w2_ls^T)
      b2 [2*A, 1]
    Zero-padding H -> Hp is exact (ReLU(0)=0 and zero w2 columns).
    """
    D, H = raw["w1_mu"].shape
    A = raw["w2_mu"].shape[1]
    Hp = max(_round_up(H, 64), 64)          # 2*Hp is a multiple of 128

    w1T = jnp.zeros((2 * Hp, D), jnp.float32)
    w1T = w1T.at[:H, :].set(raw["w1_mu"].T.astype(jnp.float32))
    w1T = w1T.at[Hp:Hp + H, :].set(raw["w1_ls"].T.astype(jnp.float32))

    b1T = jnp.zeros((2 * Hp, 1), jnp.float32)
    b1T = b1T.at[:H, 0].set(raw["b1_mu"][0].astype(jnp.float32))
    b1T = b1T.at[Hp:Hp + H, 0].set(raw["b1_ls"][0].astype(jnp.float32))

    w2T = jnp.zeros((2 * A, 2 * Hp), jnp.float32)
    w2T = w2T.at[:A, :H].set(raw["w2_mu"].T.astype(jnp.float32))
    w2T = w2T.at[A:, Hp:Hp + H].set(raw["w2_ls"].T.astype(jnp.float32))

    b2T = jnp.concatenate([raw["b2_mu"], raw["b2_ls"]], axis=1).astype(jnp.float32).T

    return {
        "w1": w1T.astype(mxu_dtype),        # MXU operands (bf16 by default)
        "b1": b1T,                          # biases stay f32 (added post-matmul)
        "w2": w2T.astype(mxu_dtype),
        "b2": b2T,
        "dims": (D, H, A, Hp),
    }


def _choose_tb(B, block_b):
    """Batch tile (lane dim): multiple of 128, large, and >=2 grid steps for big B."""
    cap = max(128, _round_up(block_b, 128))
    if B >= 1024 and cap >= 512:
        n_steps = max(2, _cdiv(B, cap))                 # >=2 steps for v7x's two TCs
        tb = _round_up(_cdiv(B, n_steps), 128)
        tb = max(128, min(tb, cap))
    else:
        tb = min(_round_up(B, 128), cap)
    return tb


# --------------------------------------------------------------------------- wrapper
def actor_forward(x, packed, eps, *, block_b=1024, interpret=False):
    """Stochastic Actor forward (deterministic=False, return_logpi=True, rsample=True).

    x:   [B, D] float32 state
    eps: [B, A] float32 standard-normal noise
    Returns (a [B, A], logpi [B]).
    """
    D, H, A, Hp = packed["dims"]
    B = x.shape[0]
    assert x.shape[1] == D and eps.shape == (B, A)
    mxu_dtype = packed["w1"].dtype

    TB = _choose_tb(B, block_b)
    Bp = _round_up(B, TB)
    OUT_ROWS = _round_up(A + 1, 8)

    # Host-side transpose (layout plumbing): batch goes on lanes.
    xT = x.T.astype(mxu_dtype)                               # (D, B)
    epsT = eps.T.astype(jnp.float32)                         # (A, B)
    if Bp != B:
        xT = jnp.zeros((D, Bp), mxu_dtype).at[:, :B].set(xT)
        epsT = jnp.zeros((A, Bp), jnp.float32).at[:, :B].set(epsT)

    kernel = functools.partial(actor_kernel, action_n=A, out_rows=OUT_ROWS)

    out = pl.pallas_call(
        kernel,
        out_shape=jax.ShapeDtypeStruct((OUT_ROWS, Bp), jnp.float32),
        grid_spec=pltpu.PrefetchScalarGridSpec(
            num_scalar_prefetch=0,
            grid=(Bp // TB,),
            in_specs=[
                pl.BlockSpec((D, TB), lambda i: (0, i)),           # xT tile (pipelined)
                pl.BlockSpec((2 * Hp, D), lambda i: (0, 0)),       # w1T (resident)
                pl.BlockSpec((2 * Hp, 1), lambda i: (0, 0)),       # b1T (resident)
                pl.BlockSpec((2 * A, 2 * Hp), lambda i: (0, 0)),   # w2T (resident)
                pl.BlockSpec((2 * A, 1), lambda i: (0, 0)),        # b2T (resident)
                pl.BlockSpec((A, TB), lambda i: (0, i)),           # epsT tile (pipelined)
            ],
            out_specs=pl.BlockSpec((OUT_ROWS, TB), lambda i: (0, i)),
        ),
        compiler_params=pltpu.CompilerParams(
            dimension_semantics=("parallel",),       # batch tiles shard across TCs (v7x)
            vmem_limit_bytes=32 * 1024 * 1024,
        ),
        interpret=interpret,
    )(xT, packed["w1"], packed["b1"], packed["w2"], packed["b2"], epsT)

    a = out[:A, :B].T
    logpi = out[A, :B]
    return a, logpi


# --------------------------------------------------------------------------- references
def ref_actor_raw(x, raw, eps):
    """Pure-JAX f32 reference with the original (unfused, untransposed) parameters."""
    hi = jax.lax.Precision.HIGHEST
    h_mu = jnp.maximum(jnp.dot(x, raw["w1_mu"], precision=hi) + raw["b1_mu"], 0.0)
    mu = jnp.dot(h_mu, raw["w2_mu"], precision=hi) + raw["b2_mu"]
    h_ls = jnp.maximum(jnp.dot(x, raw["w1_ls"], precision=hi) + raw["b1_ls"], 0.0)
    logstd = jnp.clip(jnp.dot(h_ls, raw["w2_ls"], precision=hi) + raw["b2_ls"],
                      LOGSTD_MIN, LOGSTD_MAX)
    std = jnp.exp(logstd)
    a_pre = mu + std * eps
    a_t = jnp.tanh(a_pre)
    logp = -0.5 * eps * eps - logstd - 0.5 * LOG2PI
    corr = jnp.log(jnp.clip(1.0 - a_t * a_t, 0.0, 1.0) + 1e-6)
    lp = jnp.sum(logp - corr, axis=-1)
    return a_t * ACTION_SCALE + ACTION_SHIFT, lp


def ref_actor_packed(x, packed, eps):
    """Pure-JAX reference applying the same fusion/padding/transpose/dtype casts."""
    D, H, A, Hp = packed["dims"]
    dt = packed["w1"].dtype
    xT = x.T.astype(dt)
    hT = jnp.maximum(jnp.dot(packed["w1"], xT,
                             preferred_element_type=jnp.float32) + packed["b1"], 0.0)
    yT = jnp.dot(packed["w2"], hT.astype(dt),
                 preferred_element_type=jnp.float32) + packed["b2"]
    mu = yT[:A, :].T
    logstd = jnp.clip(yT[A:, :].T, LOGSTD_MIN, LOGSTD_MAX)
    std = jnp.exp(logstd)
    a_pre = mu + std * eps
    a_t = jnp.tanh(a_pre)
    logp = -0.5 * eps * eps - logstd - 0.5 * LOG2PI
    corr = jnp.log(jnp.clip(1.0 - a_t * a_t, 0.0, 1.0) + 1e-6)
    lp = jnp.sum(logp - corr, axis=-1)
    return a_t * ACTION_SCALE + ACTION_SHIFT, lp


# --------------------------------------------------------------------------- init / demo
def init_raw_params(key, D, H, A):
    ks = jax.random.split(key, 8)
    s_in = 1.0 / math.sqrt(D)
    s_h = 1.0 / math.sqrt(H)
    return {
        # mu head
        "w1_mu": jax.random.uniform(ks[0], (D, H), jnp.float32, -s_in, s_in),
        "b1_mu": jax.random.uniform(ks[1], (1, H), jnp.float32, -s_in, s_in),
        "w2_mu": jax.random.uniform(ks[2], (H, A), jnp.float32, -s_h, s_h),
        "b2_mu": jax.random.uniform(ks[3], (1, A), jnp.float32, -s_h, s_h),
        # logstd head (last bias filled with 0, as in the PyTorch __init__)
        "w1_ls": jax.random.uniform(ks[4], (D, H), jnp.float32, -s_in, s_in),
        "b1_ls": jax.random.uniform(ks[5], (1, H), jnp.float32, -s_in, s_in),
        "w2_ls": jax.random.uniform(ks[6], (H, A), jnp.float32, -s_h, s_h),
        "b2_ls": jnp.zeros((1, A), jnp.float32),
    }


if __name__ == "__main__":
    D, H, A = 32, 32, 4
    key = jax.random.PRNGKey(0)
    k_p, k_x1, k_e1, k_x2, k_e2 = jax.random.split(key, 5)
    raw = init_raw_params(k_p, D, H, A)

    # ---- Config 1: f32 MXU operands, tiny batch (single 128-lane tile); checked
    #                against the original (unfused, unpadded) f32 reference.
    B1 = 8
    x1 = jax.random.normal(k_x1, (B1, D), jnp.float32)
    eps1 = jax.random.normal(k_e1, (B1, A), jnp.float32)
    packed_f32 = pack_actor_params(raw, mxu_dtype=jnp.float32)
    a1, lp1 = actor_forward(x1, packed_f32, eps1)
    jax.block_until_ready((a1, lp1))
    a1_ref, lp1_ref = ref_actor_raw(x1, raw, eps1)
    assert a1.shape == (B1, A) and lp1.shape == (B1,)
    assert jnp.allclose(a1, a1_ref, atol=1e-3, rtol=1e-3), "f32 action mismatch"
    assert jnp.allclose(lp1, lp1_ref, atol=5e-3, rtol=5e-3), "f32 logpi mismatch"

    # ---- Config 2: bf16 MXU operands (f32 accumulate + f32 elementwise tail),
    #                multi-step parallel grid with batch padding (B=200 -> 2x TB=128);
    #                checked against a reference with the identical packing/casts.
    B2 = 200
    x2 = jax.random.normal(k_x2, (B2, D), jnp.float32)
    eps2 = jax.random.normal(k_e2, (B2, A), jnp.float32)
    packed_bf16 = pack_actor_params(raw, mxu_dtype=jnp.bfloat16)
    a2, lp2 = actor_forward(x2, packed_bf16, eps2, block_b=128)
    jax.block_until_ready((a2, lp2))
    a2_ref, lp2_ref = ref_actor_packed(x2, packed_bf16, eps2)
    assert a2.shape == (B2, A) and lp2.shape == (B2,)
    assert jnp.allclose(a2, a2_ref, atol=1e-3, rtol=1e-3), "bf16 action mismatch"
    assert jnp.allclose(lp2, lp2_ref, atol=5e-3, rtol=5e-3), "bf16 logpi mismatch"

    print("KERNEL_OK")
</pallas_src>

<mosaic_0001>
module attributes {stable_mosaic.version = 11 : i64} {
  func.func @actor_kernel(%arg0: i32, %arg1: memref<32x128xf32, #tpu.memory_space<vmem>>, %arg2: memref<128x32xf32, #tpu.memory_space<vmem>>, %arg3: memref<128x1xf32, #tpu.memory_space<vmem>>, %arg4: memref<8x128xf32, #tpu.memory_space<vmem>>, %arg5: memref<8x1xf32, #tpu.memory_space<vmem>>, %arg6: memref<4x128xf32, #tpu.memory_space<vmem>>, %arg7: memref<8x128xf32, #tpu.memory_space<vmem>>) attributes {dimension_semantics = [#tpu.dimension_semantics<parallel>], iteration_bounds = array<i64: 1>, scalar_prefetch = 0 : i64, scratch_operands = 0 : i64, tpu.core_type = #tpu.core_type<tc>, window_params = [{transform_indices = @transform_0, window_bounds = array<i64: 32, 128>}, {pipeline_mode = #tpu.pipeline_mode<synchronous>, transform_indices = @transform_1, window_bounds = array<i64: 128, 32>}, {pipeline_mode = #tpu.pipeline_mode<synchronous>, transform_indices = @transform_2, window_bounds = array<i64: 128, 1>}, {pipeline_mode = #tpu.pipeline_mode<synchronous>, transform_indices = @transform_3, window_bounds = array<i64: 8, 128>}, {pipeline_mode = #tpu.pipeline_mode<synchronous>, transform_indices = @transform_4, window_bounds = array<i64: 8, 1>}, {transform_indices = @transform_5, window_bounds = array<i64: 4, 128>}, {transform_indices = @transform_6, window_bounds = array<i64: 8, 128>}]} {
    %c0 = arith.constant 0 : index
    %c0_0 = arith.constant 0 : index
    %0 = vector.load %arg1[%c0, %c0_0] : memref<32x128xf32, #tpu.memory_space<vmem>>, vector<32x128xf32>
    %c0_1 = arith.constant 0 : index
    %c0_2 = arith.constant 0 : index
    %1 = vector.load %arg2[%c0_1, %c0_2] : memref<128x32xf32, #tpu.memory_space<vmem>>, vector<128x32xf32>
    %cst = arith.constant dense<0.000000e+00> : vector<128x128xf32>
    %2 = tpu.matmul %1, %0, %cst {dimension_numbers = #tpu.dot_dimension_numbers<[1], [0], [0], [1], [0, 0, 1, 1], [], []>} : vector<128x32xf32>, vector<32x128xf32>, vector<128x128xf32> -> vector<128x128xf32>
    %c0_3 = arith.constant 0 : index
    %c0_4 = arith.constant 0 : index
    %3 = vector.load %arg3[%c0_3, %c0_4] : memref<128x1xf32, #tpu.memory_space<vmem>>, vector<128x1xf32>
    %4 = vector.broadcast %3 : vector<128x1xf32> to vector<128x128xf32>
    %5 = arith.addf %2, %4 : vector<128x128xf32>
    %cst_5 = arith.constant 0.000000e+00 : f32
    %6 = vector.broadcast %cst_5 : f32 to vector<128x128xf32>
    %7 = arith.maximumf %5, %6 : vector<128x128xf32>
    %c0_6 = arith.constant 0 : index
    %c0_7 = arith.constant 0 : index
    %8 = vector.load %arg4[%c0_6, %c0_7] : memref<8x128xf32, #tpu.memory_space<vmem>>, vector<8x128xf32>
    %cst_8 = arith.constant dense<0.000000e+00> : vector<8x128xf32>
    %9 = tpu.matmul %8, %7, %cst_8 {dimension_numbers = #tpu.dot_dimension_numbers<[1], [0], [0], [1], [0, 0, 1, 1], [], []>} : vector<8x128xf32>, vector<128x128xf32>, vector<8x128xf32> -> vector<8x128xf32>
    %c0_9 = arith.constant 0 : index
    %c0_10 = arith.constant 0 : index
    %10 = vector.load %arg5[%c0_9, %c0_10] : memref<8x1xf32, #tpu.memory_space<vmem>>, vector<8x1xf32>
    %11 = vector.broadcast %10 : vector<8x1xf32> to vector<8x128xf32>
    %12 = arith.addf %9, %11 : vector<8x128xf32>
    %13 = vector.extract_strided_slice %12 {offsets = [0, 0], sizes = [4, 128], strides = [1, 1]} : vector<8x128xf32> to vector<4x128xf32>
    %14 = vector.extract_strided_slice %12 {offsets = [4, 0], sizes = [4, 128], strides = [1, 1]} : vector<8x128xf32> to vector<4x128xf32>
    %cst_11 = arith.constant -2.000000e+01 : f32
    %cst_12 = arith.constant 2.000000e+00 : f32
    %15 = vector.broadcast %cst_11 : f32 to vector<4x128xf32>
    %16 = arith.maximumf %15, %14 : vector<4x128xf32>
    %17 = vector.broadcast %cst_12 : f32 to vector<4x128xf32>
    %18 = arith.minimumf %17, %16 : vector<4x128xf32>
    %19 = math.exp %18 : vector<4x128xf32>
    %c0_13 = arith.constant 0 : index
    %c0_14 = arith.constant 0 : index
    %20 = vector.load %arg6[%c0_13, %c0_14] : memref<4x128xf32, #tpu.memory_space<vmem>>, vector<4x128xf32>
    %21 = arith.mulf %19, %20 : vector<4x128xf32>
    %22 = arith.addf %13, %21 : vector<4x128xf32>
    %23 = math.tanh %22 : vector<4x128xf32>
    %cst_15 = arith.constant -5.000000e-01 : f32
    %24 = vector.broadcast %cst_15 : f32 to vector<4x128xf32>
    %25 = arith.mulf %24, %20 : vector<4x128xf32>
    %26 = arith.mulf %25, %20 : vector<4x128xf32>
    %27 = arith.subf %26, %18 : vector<4x128xf32>
    %cst_16 = arith.constant 0.918938517 : f32
    %28 = vector.broadcast %cst_16 : f32 to vector<4x128xf32>
    %29 = arith.subf %27, %28 : vector<4x128xf32>
    %30 = arith.mulf %23, %23 : vector<4x128xf32>
    %cst_17 = arith.constant 1.000000e+00 : f32
    %31 = vector.broadcast %cst_17 : f32 to vector<4x128xf32>
    %32 = arith.subf %31, %30 : vector<4x128xf32>
    %cst_18 = arith.constant 0.000000e+00 : f32
    %cst_19 = arith.constant 1.000000e+00 : f32
    %33 = vector.broadcast %cst_18 : f32 to vector<4x128xf32>
    %34 = arith.maximumf %33, %32 : vector<4x128xf32>
    %35 = vector.broadcast %cst_19 : f32 to vector<4x128xf32>
    %36 = arith.minimumf %35, %34 : vector<4x128xf32>
    %cst_20 = arith.constant 9.99999997E-7 : f32
    %37 = vector.broadcast %cst_20 : f32 to vector<4x128xf32>
    %38 = arith.addf %36, %37 : vector<4x128xf32>
    %39 = math.log %38 : vector<4x128xf32>
    %40 = arith.subf %29, %39 : vector<4x128xf32>
    %cst_21 = arith.constant dense<0.000000e+00> : vector<128xf32>
    %41 = vector.multi_reduction <add>, %40, %cst_21 [0] : vector<4x128xf32> to vector<128xf32>
    %42 = vector.shape_cast %41 : vector<128xf32> to vector<1x128xf32>
    %cst_22 = arith.constant 1.000000e+00 : f32
    %43 = vector.broadcast %cst_22 : f32 to vector<4x128xf32>
    %44 = arith.mulf %23, %43 : vector<4x128xf32>
    %cst_23 = arith.constant 0.000000e+00 : f32
    %45 = vector.broadcast %cst_23 : f32 to vector<4x128xf32>
    %46 = arith.addf %44, %45 : vector<4x128xf32>
    %c0_24 = arith.constant 0 : index
    %c0_25 = arith.constant 0 : index
    %47 = vector.load %arg7[%c0_24, %c0_25] : memref<8x128xf32, #tpu.memory_space<vmem>>, vector<4x128xf32>
    tpu.vector_store %arg7[%c0_24, %c0_25], %46 {strides = array<i32>} : memref<8x128xf32, #tpu.memory_space<vmem>>, vector<4x128xf32>,
    %c4 = arith.constant 4 : index
    %c0_26 = arith.constant 0 : index
    %48 = vector.load %arg7[%c4, %c0_26] : memref<8x128xf32, #tpu.memory_space<vmem>>, vector<1x128xf32>
    tpu.vector_store %arg7[%c4, %c0_26], %42 {strides = array<i32>} : memref<8x128xf32, #tpu.memory_space<vmem>>, vector<1x128xf32>,
    %cst_27 = arith.constant 0.000000e+00 : f32
    %49 = vector.broadcast %cst_27 : f32 to vector<3x128xf32>
    %c5 = arith.constant 5 : index
    %c0_28 = arith.constant 0 : index
    %50 = vector.load %arg7[%c5, %c0_28] : memref<8x128xf32, #tpu.memory_space<vmem>>, vector<3x128xf32>
    tpu.vector_store %arg7[%c5, %c0_28], %49 {strides = array<i32>} : memref<8x128xf32, #tpu.memory_space<vmem>>, vector<3x128xf32>,
    return
  }
  func.func @transform_0(%arg0: i32) -> (i32, i32) {
    %c0_i32 = arith.constant 0 : i32
    %c0_i32_0 = arith.constant 0 : i32
    return %c0_i32, %arg0 : i32, i32
  }
  func.func @transform_1(%arg0: i32) -> (i32, i32) {
    %c0_i32 = arith.constant 0 : i32
    %c0_i32_0 = arith.constant 0 : i32
    %c0_i32_1 = arith.constant 0 : i32
    return %c0_i32, %c0_i32_0 : i32, i32
  }
  func.func @transform_2(%arg0: i32) -> (i32, i32) {
    %c0_i32 = arith.constant 0 : i32
    %c0_i32_0 = arith.constant 0 : i32
    %c0_i32_1 = arith.constant 0 : i32
    return %c0_i32, %c0_i32_0 : i32, i32
  }
  func.func @transform_3(%arg0: i32) -> (i32, i32) {
    %c0_i32 = arith.constant 0 : i32
    %c0_i32_0 = arith.constant 0 : i32
    %c0_i32_1 = arith.constant 0 : i32
    return %c0_i32, %c0_i32_0 : i32, i32
  }
  func.func @transform_4(%arg0: i32) -> (i32, i32) {
    %c0_i32 = arith.constant 0 : i32
    %c0_i32_0 = arith.constant 0 : i32
    %c0_i32_1 = arith.constant 0 : i32
    return %c0_i32, %c0_i32_0 : i32, i32
  }
  func.func @transform_5(%arg0: i32) -> (i32, i32) {
    %c0_i32 = arith.constant 0 : i32
    %c0_i32_0 = arith.constant 0 : i32
    return %c0_i32, %arg0 : i32, i32
  }
  func.func @transform_6(%arg0: i32) -> (i32, i32) {
    %c0_i32 = arith.constant 0 : i32
    %c0_i32_0 = arith.constant 0 : i32
    return %c0_i32, %arg0 : i32, i32
  }
}

</mosaic_0001>

<llo_original>
// kernel: tpu_custom_call.1
$region0: #{tpu_custom_call.1}
  #allocation0 [shape = 'u32[]', space=smem, size = 0x4, offset = 0x4, fixed_abs, tag = 'smem constant byte address 0x4 - core index']
  #allocation1 [shape = 'u32[144,128]{1,0:T(1,128)}', space=vmem, size = 0x12000, scoped, tag = 'internal scratch']
  %s0 = inlined_call_operand.vmem [shape: f32[32,128], index: 0, kind: input, shape index: {}]
  %s1 = inlined_call_operand.vmem [shape: f32[128,32], index: 1, kind: input, shape index: {}]
  %s2 = inlined_call_operand.vmem [shape: f32[128,1], index: 2, kind: input, shape index: {}]
  %s3 = inlined_call_operand.vmem [shape: f32[8,128], index: 3, kind: input, shape index: {}]
  %s4 = inlined_call_operand.vmem [shape: f32[8,1], index: 4, kind: input, shape index: {}]
  %s5 = inlined_call_operand.vmem [shape: f32[4,128], index: 5, kind: input, shape index: {}]
  %s6 = inlined_call_operand.hbm [shape: f32[8,128], index: 6, kind: output, shape index: {}]
  %s7 = sld [smem:[#allocation0]]
  $region34: #{tpu_custom_call.1} parent=0
    _
  %s9 = ssub.s32 1, %s7
  %s10 = scalar_select 0, %s9, %s7
  $region1: #{tpu_custom_call.1} parent=0
    #allocation2 [shape = 'u8[4096]{0}', space=vmem, size = 0x1000, scoped, tag = 'output window, operand 0, single buffered']
    #allocation3 [shape = 's32[1]{0}', space=sflag, size = 0x4, scoped, tag = 'scoped memory for tpu_custom_call.1']
    %11 = vsyncpa [#allocation3], 0
    // Predicated region
    $region2: #{tpu_custom_call.1} parent=1 // pred_check
      _
    $region3: #{tpu_custom_call.1} parent=1 // pred_check_branch
      %13 = sbr.rel (0) target = $region5
    $region4: #{tpu_custom_call.1} parent=1 // pred_region
      _
    $region5: #{tpu_custom_call.1} parent=1 // pred_fallthru
      _
    // Predicated region
    $region6: #{tpu_custom_call.1} parent=1 // pred_check
      _
    $region7: #{tpu_custom_call.1} parent=1 // pred_check_branch
      %15 = sbr.rel (0) target = $region9
    $region8: #{tpu_custom_call.1} parent=1 // pred_region
      _
    $region9: #{tpu_custom_call.1} parent=1 // pred_fallthru
      _
    // Predicated region
    $region10: #{tpu_custom_call.1} parent=1 // pred_check
      _
    $region11: #{tpu_custom_call.1} parent=1 // pred_check_branch
      %17 = sbr.rel (0) target = $region13
    $region12: #{tpu_custom_call.1} parent=1 // pred_region
      _
    $region13: #{tpu_custom_call.1} parent=1 // pred_fallthru
      _
    // Predicated region
    $region14: #{tpu_custom_call.1} parent=1 // pred_check
      _
    $region15: #{tpu_custom_call.1} parent=1 // pred_check_branch
      %19 = sbr.rel (0) target = $region17
    $region16: #{tpu_custom_call.1} parent=1 // pred_region
      _
    $region17: #{tpu_custom_call.1} parent=1 // pred_fallthru
      _
    // Predicated region
    $region18: #{tpu_custom_call.1} parent=1 // pred_check
      _
    $region19: #{tpu_custom_call.1} parent=1 // pred_check_branch
      %21 = sbr.rel (0) target = $region21
    $region20: #{tpu_custom_call.1} parent=1 // pred_region
      _
    $region21: #{tpu_custom_call.1} parent=1 // pred_fallthru
      _
    // Predicated region
    $region22: #{tpu_custom_call.1} parent=1 // pred_check
      _
    $region23: #{tpu_custom_call.1} parent=1 // pred_check_branch
      %23 = sbr.rel (0) target = $region25
    $region24: #{tpu_custom_call.1} parent=1 // pred_region
      _
    $region25: #{tpu_custom_call.1} parent=1 // pred_fallthru
      _
    %v24 = vld [vmem:[%s0] sm:$0xff]
    %v25 = vld [vmem:[%s0 + $0x8] sm:$0xff]
    %v26 = vld [vmem:[%s0 + $0x10] sm:$0xff]
    %v27 = vld [vmem:[%s0 + $0x18] sm:$0xff]
    %v28 = vld [vmem:[%s1] sm:$0xff]
    %v29 = vld [vmem:[%s1 + $0x8] sm:$0xff]
    %v30 = vld [vmem:[%s1 + $0x10] sm:$0xff]
    %v31 = vld [vmem:[%s1 + $0x18] sm:$0xff]
    %v32 = vld [vmem:[%s1 + $0x20] sm:$0xff]
    %v33 = vld [vmem:[%s1 + $0x28] sm:$0xff]
    %v34 = vld [vmem:[%s1 + $0x30] sm:$0xff]
    %v35 = vld [vmem:[%s1 + $0x38] sm:$0xff]
    %v36 = vld [vmem:[%s1 + $0x40] sm:$0xff]
    %v37 = vld [vmem:[%s1 + $0x48] sm:$0xff]
    %v38 = vld [vmem:[%s1 + $0x50] sm:$0xff]
    %v39 = vld [vmem:[%s1 + $0x58] sm:$0xff]
    %v40 = vld [vmem:[%s1 + $0x60] sm:$0xff]
    %v41 = vld [vmem:[%s1 + $0x68] sm:$0xff]
    %v42 = vld [vmem:[%s1 + $0x70] sm:$0xff]
    %v43 = vld [vmem:[%s1 + $0x78] sm:$0xff]
    %v44 = vld [vmem:[%s2] sm:$0xff]
    %v45 = vld [vmem:[%s2 + $0x8] sm:$0xff]
    %v46 = vld [vmem:[%s2 + $0x10] sm:$0xff]
    %v47 = vld [vmem:[%s2 + $0x18] sm:$0xff]
    %v48 = vld [vmem:[%s2 + $0x20] sm:$0xff]
    %v49 = vld [vmem:[%s2 + $0x28] sm:$0xff]
    %v50 = vld [vmem:[%s2 + $0x30] sm:$0xff]
    %v51 = vld [vmem:[%s2 + $0x38] sm:$0xff]
    %v52 = vld [vmem:[%s2 + $0x40] sm:$0xff]
    %v53 = vld [vmem:[%s2 + $0x48] sm:$0xff]
    %v54 = vld [vmem:[%s2 + $0x50] sm:$0xff]
    %v55 = vld [vmem:[%s2 + $0x58] sm:$0xff]
    %v56 = vld [vmem:[%s2 + $0x60] sm:$0xff]
    %v57 = vld [vmem:[%s2 + $0x68] sm:$0xff]
    %v58 = vld [vmem:[%s2 + $0x70] sm:$0xff]
    %v59 = vld [vmem:[%s2 + $0x78] sm:$0xff]
    %61 = vset.pattern.permute.xlu0 0
    %62 = vperm.xlu0 %61, %v44
    %v63 = vpop.permute.xlu0 %62
    %66 = vset.pattern.permute.xlu0 0
    %67 = vperm.xlu0 %66, %v45
    %v68 = vpop.permute.xlu0 %67
    %71 = vset.pattern.permute.xlu0 0
    %72 = vperm.xlu0 %71, %v46
    %v73 = vpop.permute.xlu0 %72
    %76 = vset.pattern.permute.xlu0 0
    %77 = vperm.xlu0 %76, %v47
    %v78 = vpop.permute.xlu0 %77
    %81 = vset.pattern.permute.xlu0 0
    %82 = vperm.xlu0 %81, %v48
    %v83 = vpop.permute.xlu0 %82
    %86 = vset.pattern.permute.xlu0 0
    %87 = vperm.xlu0 %86, %v49
    %v88 = vpop.permute.xlu0 %87
    %91 = vset.pattern.permute.xlu0 0
    %92 = vperm.xlu0 %91, %v50
    %v93 = vpop.permute.xlu0 %92
    %96 = vset.pattern.permute.xlu0 0
    %97 = vperm.xlu0 %96, %v51
    %v98 = vpop.permute.xlu0 %97
    %101 = vset.pattern.permute.xlu0 0
    %102 = vperm.xlu0 %101, %v52
    %v103 = vpop.permute.xlu0 %102
    %106 = vset.pattern.permute.xlu0 0
    %107 = vperm.xlu0 %106, %v53
    %v108 = vpop.permute.xlu0 %107
    %111 = vset.pattern.permute.xlu0 0
    %112 = vperm.xlu0 %111, %v54
    %v113 = vpop.permute.xlu0 %112
    %116 = vset.pattern.permute.xlu0 0
    %117 = vperm.xlu0 %116, %v55
    %v118 = vpop.permute.xlu0 %117
    %121 = vset.pattern.permute.xlu0 0
    %122 = vperm.xlu0 %121, %v56
    %v123 = vpop.permute.xlu0 %122
    %126 = vset.pattern.permute.xlu0 0
    %127 = vperm.xlu0 %126, %v57
    %v128 = vpop.permute.xlu0 %127
    %131 = vset.pattern.permute.xlu0 0
    %132 = vperm.xlu0 %131, %v58
    %v133 = vpop.permute.xlu0 %132
    %136 = vset.pattern.permute.xlu0 0
    %137 = vperm.xlu0 %136, %v59
    %v138 = vpop.permute.xlu0 %137
    %vm140 = vcmask 261120
    %v142 = vsel %vm140, %v28, 0
    %v145 = vsel %vm140, %v29, 0
    %v148 = vsel %vm140, %v30, 0
    %v151 = vsel %vm140, %v31, 0
    %v154 = vsel %vm140, %v32, 0
    %v157 = vsel %vm140, %v33, 0
    %v160 = vsel %vm140, %v34, 0
    %v163 = vsel %vm140, %v35, 0
    %v166 = vsel %vm140, %v36, 0
    %v169 = vsel %vm140, %v37, 0
    %v172 = vsel %vm140, %v38, 0
    %v175 = vsel %vm140, %v39, 0
    %v178 = vsel %vm140, %v40, 0
    %v181 = vsel %vm140, %v41, 0
    %v184 = vsel %vm140, %v42, 0
    %v187 = vsel %vm140, %v43, 0
    %189 = vmatprep.subr.mxu0 0.0
    %190 = vmatpush1.msra.mxu0 %v24
    %191 = vmatprep.subr.mxu0 0.0
    %192 = vmatpush1.msra.mxu0 %v25
    %193 = vmatprep.subr.mxu0 0.0
    %194 = vmatpush1.msra.mxu0 %v26
    %195 = vmatprep.subr.mxu0 0.0
    %196 = vmatpush1.msra.mxu0 %v27
    %197 = vmatprep.subr.mxu0 0.0
    %198 = vmatpush1.msra.mxu0 0.0
    %199 = vmatprep.subr.mxu0 0.0
    %200 = vmatpush1.msra.mxu0 0.0
    %201 = vmatprep.subr.mxu0 0.0
    %202 = vmatpush1.msra.mxu0 0.0
    %203 = vmatprep.subr.mxu0 0.0
    %204 = vmatpush1.msra.mxu0 0.0
    %205 = vmatprep.subr.mxu0 0.0
    %206 = vmatpush1.msra.mxu0 0.0
    %207 = vmatprep.subr.mxu0 0.0
    %208 = vmatpush1.msra.mxu0 0.0
    %209 = vmatprep.subr.mxu0 0.0
    %210 = vmatpush1.msra.mxu0 0.0
    %211 = vmatprep.subr.mxu0 0.0
    %212 = vmatpush1.msra.mxu0 0.0
    %213 = vmatprep.subr.mxu0 0.0
    %214 = vmatpush1.msra.mxu0 0.0
    %215 = vmatprep.subr.mxu0 0.0
    %216 = vmatpush1.msra.mxu0 0.0
    %217 = vmatprep.subr.mxu0 0.0
    %218 = vmatpush1.msra.mxu0 0.0
    %219 = vmatprep.subr.mxu0 0.0
    %220 = vmatpush1.msra.mxu0 0.0
    %221 = vmatprep.subr.mxu0 0.0
    %222 = vmatpush1.msra.mxu0 0.0
    %223 = vmatprep.subr.mxu0 0.0
    %224 = vmatpush1.msra.mxu0 0.0
    %225 = vmatprep.subr.mxu0 0.0
    %226 = vmatpush1.msra.mxu0 0.0
    %227 = vmatprep.subr.mxu0 0.0
    %228 = vmatpush1.msra.mxu0 0.0
    %229 = vmatprep.subr.mxu0 0.0
    %230 = vmatpush1.msra.mxu0 0.0
    %231 = vmatprep.subr.mxu0 0.0
    %232 = vmatpush1.msra.mxu0 0.0
    %233 = vmatprep.subr.mxu0 0.0
    %234 = vmatpush1.msra.mxu0 0.0
    %235 = vmatprep.subr.mxu0 0.0
    %236 = vmatpush1.msra.mxu0 0.0
    %237 = vmatprep.subr.mxu0 0.0
    %238 = vmatpush1.msra.mxu0 0.0
    %239 = vmatprep.subr.mxu0 0.0
    %240 = vmatpush1.msra.mxu0 0.0
    %241 = vmatprep.subr.mxu0 0.0
    %242 = vmatpush1.msra.mxu0 0.0
    %243 = vmatprep.subr.mxu0 0.0
    %244 = vmatpush1.msra.mxu0 0.0
    %245 = vmatprep.subr.mxu0 0.0
    %246 = vmatpush1.msra.mxu0 0.0
    %247 = vmatprep.subr.mxu0 0.0
    %248 = vmatpush1.msra.mxu0 0.0
    %249 = vmatprep.subr.mxu0 0.0
    %250 = vmatpush1.msra.mxu0 0.0
    %251 = vmatprep.subr.mxu0 0.0
    %252 = vmatpush1.msra.mxu0 0.0
    %253 = vmatprep.mubr.f32.mxu0 0.0
    %254 = vmatmul.mubr.f32.gmra.mrb[0].mxu0 %v142
    %v255 = vpop.f32.mrb[0].mxu0
    %v256 = vadd.f32 %v63, %v255
    %v257 = vpop.f32.mrb[0].mxu0
    %258 = vmatprep.mubr.f32.mxu0 0.0
    %259 = vmatmul.mubr.f32.gmra.mrb[0].mxu0 %v145
    %v260 = vpop.f32.mrb[0].mxu0
    %v261 = vadd.f32 %v68, %v260
    %v262 = vpop.f32.mrb[0].mxu0
    %263 = vmatprep.mubr.f32.mxu0 0.0
    %264 = vmatmul.mubr.f32.gmra.mrb[0].mxu0 %v148
    %v265 = vpop.f32.mrb[0].mxu0
    %v266 = vadd.f32 %v73, %v265
    %v267 = vpop.f32.mrb[0].mxu0
    %268 = vmatprep.mubr.f32.mxu0 0.0
    %269 = vmatmul.mubr.f32.gmra.mrb[0].mxu0 %v151
    %v270 = vpop.f32.mrb[0].mxu0
    %v271 = vadd.f32 %v78, %v270
    %v272 = vpop.f32.mrb[0].mxu0
    %273 = vmatprep.mubr.f32.mxu0 0.0
    %274 = vmatmul.mubr.f32.gmra.mrb[0].mxu0 %v154
    %v275 = vpop.f32.mrb[0].mxu0
    %v276 = vadd.f32 %v83, %v275
    %v277 = vpop.f32.mrb[0].mxu0
    %278 = vmatprep.mubr.f32.mxu0 0.0
    %279 = vmatmul.mubr.f32.gmra.mrb[0].mxu0 %v157
    %v280 = vpop.f32.mrb[0].mxu0
    %v281 = vadd.f32 %v88, %v280
    %v282 = vpop.f32.mrb[0].mxu0
    %283 = vmatprep.mubr.f32.mxu0 0.0
    %284 = vmatmul.mubr.f32.gmra.mrb[0].mxu0 %v160
    %v285 = vpop.f32.mrb[0].mxu0
    %v286 = vadd.f32 %v93, %v285
    %v287 = vpop.f32.mrb[0].mxu0
    %288 = vmatprep.mubr.f32.mxu0 0.0
    %289 = vmatmul.mubr.f32.gmra.mrb[0].mxu0 %v163
    %v290 = vpop.f32.mrb[0].mxu0
    %v291 = vadd.f32 %v98, %v290
    %v292 = vpop.f32.mrb[0].mxu0
    %293 = vmatprep.mubr.f32.mxu0 0.0
    %294 = vmatmul.mubr.f32.gmra.mrb[0].mxu0 %v166
    %v295 = vpop.f32.mrb[0].mxu0
    %v296 = vadd.f32 %v103, %v295
    %v297 = vpop.f32.mrb[0].mxu0
    %298 = vmatprep.mubr.f32.mxu0 0.0
    %299 = vmatmul.mubr.f32.gmra.mrb[0].mxu0 %v169
    %v300 = vpop.f32.mrb[0].mxu0
    %v301 = vadd.f32 %v108, %v300
    %v302 = vpop.f32.mrb[0].mxu0
    %303 = vmatprep.mubr.f32.mxu0 0.0
    %304 = vmatmul.mubr.f32.gmra.mrb[0].mxu0 %v172
    %v305 = vpop.f32.mrb[0].mxu0
    %v306 = vadd.f32 %v113, %v305
    %v307 = vpop.f32.mrb[0].mxu0
    %308 = vmatprep.mubr.f32.mxu0 0.0
    %309 = vmatmul.mubr.f32.gmra.mrb[0].mxu0 %v175
    %v310 = vpop.f32.mrb[0].mxu0
    %v311 = vadd.f32 %v118, %v310
    %v312 = vpop.f32.mrb[0].mxu0
    %313 = vmatprep.mubr.f32.mxu0 0.0
    %314 = vmatmul.mubr.f32.gmra.mrb[0].mxu0 %v178
    %v315 = vpop.f32.mrb[0].mxu0
    %v316 = vadd.f32 %v123, %v315
    %v317 = vpop.f32.mrb[0].mxu0
    %318 = vmatprep.mubr.f32.mxu0 0.0
    %319 = vmatmul.mubr.f32.gmra.mrb[0].mxu0 %v181
    %v320 = vpop.f32.mrb[0].mxu0
    %v321 = vadd.f32 %v128, %v320
    %v322 = vpop.f32.mrb[0].mxu0
    %323 = vmatprep.mubr.f32.mxu0 0.0
    %324 = vmatmul.mubr.f32.gmra.mrb[0].mxu0 %v184
    %v325 = vpop.f32.mrb[0].mxu0
    %v326 = vadd.f32 %v133, %v325
    %v327 = vpop.f32.mrb[0].mxu0
    %328 = vmatprep.mubr.f32.mxu0 0.0
    %329 = vmatmul.mubr.f32.gmra.mrb[0].mxu0 %v187
    %v330 = vpop.f32.mrb[0].mxu0
    %v331 = vadd.f32 %v138, %v330
    %v332 = vpop.f32.mrb[0].mxu0
    %333 = vdwg.mxu0
    %v334 = vmax.f32 %v256, 0.0
    %v335 = vmax.f32 %v261, 0.0
    %v336 = vmax.f32 %v266, 0.0
    %v337 = vmax.f32 %v271, 0.0
    %v338 = vmax.f32 %v276, 0.0
    %v339 = vmax.f32 %v281, 0.0
    %v340 = vmax.f32 %v286, 0.0
    %v341 = vmax.f32 %v291, 0.0
    %v342 = vmax.f32 %v296, 0.0
    %v343 = vmax.f32 %v301, 0.0
    %v344 = vmax.f32 %v306, 0.0
    %v345 = vmax.f32 %v311, 0.0
    %v346 = vmax.f32 %v316, 0.0
    %v347 = vmax.f32 %v321, 0.0
    %v348 = vmax.f32 %v326, 0.0
    %v349 = vmax.f32 %v331, 0.0
    %v350 = vld [vmem:[%s3] sm:$0xff]
    %v351 = vld [vmem:[%s4] sm:$0xff]
    %353 = vset.pattern.permute.xlu0 0
    %354 = vperm.xlu0 %353, %v351
    %v355 = vpop.permute.xlu0 %354
    %357 = vmatprep.subr.mxu0 0.0
    %358 = vmatpush1.msra.mxu0 %v334
    %359 = vmatprep.subr.mxu0 0.0
    %360 = vmatpush1.msra.mxu0 %v335
    %361 = vmatprep.subr.mxu0 0.0
    %362 = vmatpush1.msra.mxu0 %v336
    %363 = vmatprep.subr.mxu0 0.0
    %364 = vmatpush1.msra.mxu0 %v337
    %365 = vmatprep.subr.mxu0 0.0
    %366 = vmatpush1.msra.mxu0 %v338
    %367 = vmatprep.subr.mxu0 0.0
    %368 = vmatpush1.msra.mxu0 %v339
    %369 = vmatprep.subr.mxu0 0.0
    %370 = vmatpush1.msra.mxu0 %v340
    %371 = vmatprep.subr.mxu0 0.0
    %372 = vmatpush1.msra.mxu0 %v341
    %373 = vmatprep.subr.mxu0 0.0
    %374 = vmatpush1.msra.mxu0 %v342
    %375 = vmatprep.subr.mxu0 0.0
    %376 = vmatpush1.msra.mxu0 %v343
    %377 = vmatprep.subr.mxu0 0.0
    %378 = vmatpush1.msra.mxu0 %v344
    %379 = vmatprep.subr.mxu0 0.0
    %380 = vmatpush1.msra.mxu0 %v345
    %381 = vmatprep.subr.mxu0 0.0
    %382 = vmatpush1.msra.mxu0 %v346
    %383 = vmatprep.subr.mxu0 0.0
    %384 = vmatpush1.msra.mxu0 %v347
    %385 = vmatprep.subr.mxu0 0.0
    %386 = vmatpush1.msra.mxu0 %v348
    %387 = vmatprep.subr.mxu0 0.0
    %388 = vmatpush1.msra.mxu0 %v349
    %389 = vmatprep.subr.mxu0 0.0
    %390 = vmatpush1.msra.mxu0 0.0
    %391 = vmatprep.subr.mxu0 0.0
    %392 = vmatpush1.msra.mxu0 0.0
    %393 = vmatprep.subr.mxu0 0.0
    %394 = vmatpush1.msra.mxu0 0.0
    %395 = vmatprep.subr.mxu0 0.0
    %396 = vmatpush1.msra.mxu0 0.0
    %397 = vmatprep.subr.mxu0 0.0
    %398 = vmatpush1.msra.mxu0 0.0
    %399 = vmatprep.subr.mxu0 0.0
    %400 = vmatpush1.msra.mxu0 0.0
    %401 = vmatprep.subr.mxu0 0.0
    %402 = vmatpush1.msra.mxu0 0.0
    %403 = vmatprep.subr.mxu0 0.0
    %404 = vmatpush1.msra.mxu0 0.0
    %405 = vmatprep.subr.mxu0 0.0
    %406 = vmatpush1.msra.mxu0 0.0
    %407 = vmatprep.subr.mxu0 0.0
    %408 = vmatpush1.msra.mxu0 0.0
    %409 = vmatprep.subr.mxu0 0.0
    %410 = vmatpush1.msra.mxu0 0.0
    %411 = vmatprep.subr.mxu0 0.0
    %412 = vmatpush1.msra.mxu0 0.0
    %413 = vmatprep.subr.mxu0 0.0
    %414 = vmatpush1.msra.mxu0 0.0
    %415 = vmatprep.subr.mxu0 0.0
    %416 = vmatpush1.msra.mxu0 0.0
    %417 = vmatprep.subr.mxu0 0.0
    %418 = vmatpush1.msra.mxu0 0.0
    %419 = vmatprep.subr.mxu0 0.0
    %420 = vmatpush1.msra.mxu0 0.0
    %421 = vmatprep.mubr.f32.mxu0 0.0
    %422 = vmatmul.mubr.f32.gmra.mrb[0].mxu0 %v350
    %v423 = vpop.f32.mrb[0].mxu0
    %v424 = vadd.f32 %v355, %v423
    %v425 = vpop.f32.mrb[0].mxu0
    %426 = vdwg.mxu0
    %v427 = vmax.f32 %v424, -20.0
    %v428 = vmin.f32 %v427, 2.0
    %v429 = vmul.f32 %v428, 1.442695
    %v430 = vpow.pop %v429
    %v431 = vld [vmem:[%s5] sm:$0xf]
    %v433 = vrot.slane %v431, 4
    %v435 = vmul.f32 %v430, %v433
    %v437 = vrot.slane %v435, 4
    %v439 = vadd.f32 %v424, %v437
    %v440 = vtanh.pop %v439
    %v441 = vmul.f32 %v431, -0.5
    %v442 = vmul.f32 %v441, %v431
    %v444 = vrot.slane %v428, 4
    %v446 = vsub.f32 %v442, %v444
    %v447 = vsub.f32 %v446, 0.9189385
    %v448 = vmul.f32 %v440, %v440
    %v449 = vsub.f32 1.0, %v448
    %v450 = vmax.f32 %v449, 0.0
    %v451 = vmin.f32 %v450, 1.0
    %v452 = vadd.f32 %v451, 1e-06
    %v453 = vlog2.pop %v452
    %v454 = vmul.f32 %v453, 0.6931472
    %v455 = vsub.f32 %v447, %v454
    %vm456 = vcmask 1043456
    %v457 = vsel %vm456, %v455, 0.0
    %v458 = vrot.slane %v457, 4
    %v459 = vadd.f32 %v457, %v458
    %v460 = vrot.slane %v459, 2
    %v461 = vadd.f32 %v459, %v460
    %v462 = vrot.slane %v461, 1
    %v463 = vadd.f32 %v461, %v462
    %v464 = vadd.f32 %v440, 0.0
    %465 = vst [vmem:[#allocation2] sm:$0xf] %v464
    %466 = vst [vmem:[#allocation2 + $0x4] sm:$0x1] %v463
    %467 = vst [vmem:[#allocation2 + $0x5] sm:$0x7] 0.0
    // Predicated region
    $region26: #{tpu_custom_call.1} parent=1 // pred_check
      _
    $region27: #{tpu_custom_call.1} parent=1 // pred_check_branch
      %469 = sbr.rel (0) target = $region29
    $region28: #{tpu_custom_call.1} parent=1 // pred_region
      %s471 = ssub.s32 128, 128
      %472 = vsyncadd [#allocation3], %s471
      %s474 = sshll.u32 [#allocation2], 4
      %s475 = int_to_ptr.vmem [resolvable:$true] %s474
      %477 = dma.vmem_to_hbm [thread:$0]  %s475, 128, %s6, [#allocation3]
    $region29: #{tpu_custom_call.1} parent=1 // pred_fallthru
      _
    // Predicated region
    $region30: #{tpu_custom_call.1} parent=1 // pred_check
      _
    $region31: #{tpu_custom_call.1} parent=1 // pred_check_branch
      %479 = sbr.rel (0) target = $region33
    $region32: #{tpu_custom_call.1} parent=1 // pred_region
      %480 = dma.done [#allocation3], 128
    $region33: #{tpu_custom_call.1} parent=1 // pred_fallthru
      _
    %481 = vsyncpa [#allocation3], 1

</llo_original>
